<compile_context>
chip_gen: v5e
topology: v5e:2x2
jax: 0.10.0
libtpu: 0.0.40
codegen_flags: <defaults>
</compile_context>

<pallas_src>
import functools

import jax
import jax.numpy as jnp
from jax.experimental import pallas as pl
from jax.experimental.pallas import tpu as pltpu

LANE = 128
SUBLANE = 8


def _round_up(n, m):
    return ((n + m - 1) // m) * m


# ----------------------------------------------------------------------------- kernel
def _decoder_kernel(ids_ref, emb_ref, h0_ref, c0_ref, w_cat_ref, b_ref,
                    w_out_ref, b_out_ref,
                    out_ref, h_out_ref, c_out_ref,
                    h_scr, c_scr, *, num_layers, hidden_size):
    """One decode step per grid iteration; weights VMEM-resident, state in scratch.

    ids_ref:   (1, Bp, 1)    int32 token ids for this step (padded batch)
    emb_ref:   (V, H)        bf16 embedding table (resident across steps)
    h0_ref:    (L, Bp, H)    f32 initial hidden state (read at t==0 only)
    c0_ref:    (L, Bp, H)    f32 initial cell state
    w_cat_ref: (L, 2H, Gp)   bf16 [W_ih ; W_hh], gate order (i,f,o,g), 4H padded to Gp
    b_ref:     (L, 1, Gp)    f32 b_ih + b_hh, same packing
    w_out_ref: (H, Op)       bf16 output projection (pre-transposed, padded)
    b_out_ref: (1, Op)       f32
    out_ref:   (1, Bp, Op)   f32 logits for this step
    h_out_ref: (L, Bp, H)    f32 final hidden state (written at t==T-1)
    c_out_ref: (L, Bp, H)    f32 final cell state
    h_scr/c_scr: (L, Bp, H)  f32 VMEM scratch carrying the state across steps
    """
    t = pl.program_id(0)
    H = hidden_size

    @pl.when(t == 0)
    def _init():
        h_scr[...] = h0_ref[...]
        c_scr[...] = c0_ref[...]

    # --- fused embedding lookup: one-hot(ids) @ table (MXU, no gather op) ---
    ids = ids_ref[0]                                               # (Bp, 1) int32
    Bp = ids.shape[0]
    V = emb_ref.shape[0]
    onehot = (jax.lax.broadcasted_iota(jnp.int32, (Bp, V), 1) == ids).astype(emb_ref.dtype)
    x = jnp.dot(onehot, emb_ref[...], preferred_element_type=jnp.float32)  # (Bp, H) f32
    # dropout == identity in eval mode

    # --- L stacked LSTM layers, one time step (serial dependency -> unrolled) ---
    for l in range(num_layers):
        h = h_scr[l]                                               # (Bp, H) f32
        c = c_scr[l]
        xh = jnp.concatenate([x, h], axis=-1).astype(w_cat_ref.dtype)   # (Bp, 2H) bf16
        gates = (jnp.dot(xh, w_cat_ref[l], preferred_element_type=jnp.float32)
                 + b_ref[l])                                       # (Bp, Gp) f32

        # Gate order repacked offline to (i, f, o, g): 1 sigmoid + 1 tanh per layer.
        sig = jax.nn.sigmoid(gates[:, :3 * H])
        i_g = sig[:, 0 * H:1 * H]
        f_g = sig[:, 1 * H:2 * H]
        o_g = sig[:, 2 * H:3 * H]
        g_g = jnp.tanh(gates[:, 3 * H:4 * H])

        c_new = f_g * c + i_g * g_g
        h_new = o_g * jnp.tanh(c_new)

        h_scr[l] = h_new
        c_scr[l] = c_new
        x = h_new  # inter-layer dropout == identity in eval mode

    # --- output projection ---
    out_ref[0] = (jnp.dot(x.astype(w_out_ref.dtype), w_out_ref[...],
                          preferred_element_type=jnp.float32) + b_out_ref[...])

    @pl.when(t == pl.num_programs(0) - 1)
    def _final():
        h_out_ref[...] = h_scr[...]
        c_out_ref[...] = c_scr[...]


# ----------------------------------------------------------------------------- params
def init_params(key, output_size, hidden_size, num_layers):
    """Logical (PyTorch-shaped, pre-transposed) parameters. Gate order (i,f,g,o)."""
    ks = jax.random.split(key, 6)
    H, O, L = hidden_size, output_size, num_layers
    scale = 0.1
    return {
        "embedding": scale * jax.random.normal(ks[0], (O, H), jnp.float32),
        # PyTorch stores W_ih as (4H, in); pre-transposed to (in, 4H).
        "w_ih_t": scale * jax.random.normal(ks[1], (L, H, 4 * H), jnp.float32),
        "w_hh_t": scale * jax.random.normal(ks[2], (L, H, 4 * H), jnp.float32),
        # b_ih + b_hh fused, broadcastable over batch.
        "b_sum": scale * jax.random.normal(ks[3], (L, 1, 4 * H), jnp.float32),
        # nn.Linear weight (O, H) pre-transposed to (H, O).
        "w_out_t": scale * jax.random.normal(ks[4], (H, O), jnp.float32),
        "b_out": scale * jax.random.normal(ks[5], (1, O), jnp.float32),
    }


def prepare_kernel_params(params, dtype=jnp.bfloat16):
    """Pack logical params into the kernel layout (done once, offline).

    - gate order (i,f,g,o) -> (i,f,o,g)
    - only the full 4H gate width is padded to Gp = round_up(4H, 128)
      (no per-gate padding -> no (128/H)^2 weight-byte inflation)
    - matmul weights cast to bf16; biases stay f32 (added post-accumulation)
    """
    emb = params["embedding"]            # (V, H)
    w_ih_t = params["w_ih_t"]            # (L, H, 4H)
    w_hh_t = params["w_hh_t"]            # (L, H, 4H)
    b_sum = params["b_sum"]              # (L, 1, 4H)
    w_out_t = params["w_out_t"]          # (H, O)
    b_out = params["b_out"]              # (1, O)

    V, H = emb.shape
    L = w_ih_t.shape[0]
    O = w_out_t.shape[1]
    Gp = _round_up(4 * H, LANE)
    Op = _round_up(O, LANE)
    perm = jnp.array([0, 1, 3, 2])       # (i,f,g,o) -> (i,f,o,g)

    def repack_gates(w):                 # (L, K, 4H) -> (L, K, Gp)
        K = w.shape[1]
        w4 = jnp.take(w.reshape(L, K, 4, H), perm, axis=2)
        w = w4.reshape(L, K, 4 * H)
        if Gp > 4 * H:
            w = jnp.pad(w, ((0, 0), (0, 0), (0, Gp - 4 * H)))
        return w

    # Fused [W_ih ; W_hh] so each layer is a single (Bp, 2H) @ (2H, Gp) dot.
    w_cat = jnp.concatenate([repack_gates(w_ih_t), repack_gates(w_hh_t)], axis=1)
    b_p = repack_gates(b_sum)            # (L, 1, Gp)

    w_out_p = jnp.zeros((H, Op), jnp.float32).at[:, :O].set(w_out_t)
    b_out_p = jnp.zeros((1, Op), jnp.float32).at[:, :O].set(b_out)

    return {
        "emb": emb.astype(dtype),
        "w_cat": w_cat.astype(dtype),
        "b": b_p.astype(jnp.float32),
        "w_out": w_out_p.astype(dtype),
        "b_out": b_out_p.astype(jnp.float32),
    }


# ----------------------------------------------------------------------------- wrapper
@functools.partial(jax.jit, static_argnames=("out_size",))
def decoder_decode(token_seq, hidden, cell, kp, out_size):
    """Run T decode steps inside ONE pallas_call.

    token_seq: (T, B) int32; hidden/cell: (L, B, H) f32.
    Returns (T, B, O) logits and final (L, B, H) hidden/cell.
    T=1 is exactly the PyTorch module's forward.
    """
    T, B = token_seq.shape
    L, _, H = hidden.shape
    V = kp["emb"].shape[0]
    Gp = kp["w_cat"].shape[-1]
    Op = kp["w_out"].shape[-1]
    O = out_size
    Bp = _round_up(B, SUBLANE)           # batch padded to a sublane multiple (once)

    ids_p = jnp.zeros((T, Bp, 1), jnp.int32).at[:, :B, 0].set(token_seq.astype(jnp.int32))
    h0 = jnp.zeros((L, Bp, H), jnp.float32).at[:, :B, :].set(hidden)
    c0 = jnp.zeros((L, Bp, H), jnp.float32).at[:, :B, :].set(cell)

    operands = (ids_p, kp["emb"], h0, c0, kp["w_cat"], kp["b"], kp["w_out"], kp["b_out"])

    # vmem_limit_bytes sized from actual resident bytes (with double-buffer margin).
    resident_bytes = sum(x.size * x.dtype.itemsize for x in operands)
    out_bytes = (2 * Bp * Op + 2 * L * Bp * H) * 4
    scratch_bytes = 2 * L * Bp * H * 4
    vmem_limit = int(min(64 * 1024 * 1024,
                         max(16 * 1024 * 1024,
                             2 * (resident_bytes + out_bytes) + scratch_bytes)))

    kernel = functools.partial(_decoder_kernel, num_layers=L, hidden_size=H)

    out_p, h_p, c_p = pl.pallas_call(
        kernel,
        grid=(T,),
        in_specs=[
            pl.BlockSpec((1, Bp, 1), lambda t: (t, 0, 0)),        # ids: new block per step
            pl.BlockSpec((V, H), lambda t: (0, 0)),               # embedding: resident
            pl.BlockSpec((L, Bp, H), lambda t: (0, 0, 0)),        # h0: resident
            pl.BlockSpec((L, Bp, H), lambda t: (0, 0, 0)),        # c0: resident
            pl.BlockSpec((L, 2 * H, Gp), lambda t: (0, 0, 0)),    # [W_ih;W_hh]: resident
            pl.BlockSpec((L, 1, Gp), lambda t: (0, 0, 0)),        # bias: resident
            pl.BlockSpec((H, Op), lambda t: (0, 0)),              # W_out: resident
            pl.BlockSpec((1, Op), lambda t: (0, 0)),              # b_out: resident
        ],
        out_specs=(
            pl.BlockSpec((1, Bp, Op), lambda t: (t, 0, 0)),       # per-step logits
            pl.BlockSpec((L, Bp, H), lambda t: (0, 0, 0)),        # final hidden
            pl.BlockSpec((L, Bp, H), lambda t: (0, 0, 0)),        # final cell
        ),
        out_shape=(
            jax.ShapeDtypeStruct((T, Bp, Op), jnp.float32),
            jax.ShapeDtypeStruct((L, Bp, H), jnp.float32),
            jax.ShapeDtypeStruct((L, Bp, H), jnp.float32),
        ),
        scratch_shapes=[pltpu.VMEM((L, Bp, H), jnp.float32),      # h carried across steps
                        pltpu.VMEM((L, Bp, H), jnp.float32)],     # c carried across steps
        compiler_params=pltpu.CompilerParams(
            dimension_semantics=("arbitrary",),                   # serial recurrence
            vmem_limit_bytes=vmem_limit),
    )(*operands)

    return out_p[:, :B, :O], h_p[:, :B, :], c_p[:, :B, :]


def decoder_forward(token_ids, hidden, cell, kp, out_size):
    """Single decode step — matches Decoder.forward(input, hidden, cell)."""
    out, h, c = decoder_decode(token_ids[None, :], hidden, cell, kp, out_size=out_size)
    return out[0], h, c


# ----------------------------------------------------------------------------- reference
def _reference_forward(token_ids, hidden, cell, params):
    """Pure-JAX f32 reference matching PyTorch LSTM cell semantics (gate order i,f,g,o)."""
    H = hidden.shape[-1]
    x = jnp.take(params["embedding"], token_ids, axis=0)
    h_out, c_out = [], []
    for l in range(hidden.shape[0]):
        gates = (x @ params["w_ih_t"][l] + hidden[l] @ params["w_hh_t"][l]
                 + params["b_sum"][l])
        i = jax.nn.sigmoid(gates[:, :H])
        f = jax.nn.sigmoid(gates[:, H:2 * H])
        g = jnp.tanh(gates[:, 2 * H:3 * H])
        o = jax.nn.sigmoid(gates[:, 3 * H:])
        c_new = f * cell[l] + i * g
        h_new = o * jnp.tanh(c_new)
        h_out.append(h_new)
        c_out.append(c_new)
        x = h_new
    out = x @ params["w_out_t"] + params["b_out"]
    return out, jnp.stack(h_out), jnp.stack(c_out)


def _reference_decode(token_seq, hidden, cell, params):
    outs, h, c = [], hidden, cell
    for t in range(token_seq.shape[0]):
        o, h, c = _reference_forward(token_seq[t], h, c, params)
        outs.append(o)
    return jnp.stack(outs), h, c


# ----------------------------------------------------------------------------- main
if __name__ == "__main__":
    output_size = 32
    hidden_size = 32
    num_layers = 2
    batch = 8        # multiple of 8 -> full sublane occupancy
    T = 6            # decode steps fused into one pallas_call

    key = jax.random.PRNGKey(0)
    k_param, k_tok, k_h, k_c = jax.random.split(key, 4)

    params = init_params(k_param, output_size, hidden_size, num_layers)
    kparams = prepare_kernel_params(params)

    hidden = 0.1 * jax.random.normal(k_h, (num_layers, batch, hidden_size), jnp.float32)
    cell = 0.1 * jax.random.normal(k_c, (num_layers, batch, hidden_size), jnp.float32)

    # --- single step: exact module forward semantics ---
    token_ids = jax.random.randint(k_tok, (batch,), 0, output_size, dtype=jnp.int32)
    out, h1, c1 = decoder_forward(token_ids, hidden, cell, kparams, out_size=output_size)
    jax.block_until_ready((out, h1, c1))

    ref_out, ref_h, ref_c = _reference_forward(token_ids, hidden, cell, params)
    assert out.shape == (batch, output_size)
    assert h1.shape == (num_layers, batch, hidden_size)
    assert c1.shape == (num_layers, batch, hidden_size)
    # bf16 weights -> looser tolerance vs. the f32 reference
    assert jnp.allclose(out, ref_out, atol=2e-2)
    assert jnp.allclose(h1, ref_h, atol=2e-2)
    assert jnp.allclose(c1, ref_c, atol=2e-2)

    # --- T-step decode inside one kernel launch (weights resident, state in scratch) ---
    token_seq = jax.random.randint(k_tok, (T, batch), 0, output_size, dtype=jnp.int32)
    outs, hT, cT = decoder_decode(token_seq, hidden, cell, kparams, out_size=output_size)
    jax.block_until_ready((outs, hT, cT))

    ref_outs, ref_hT, ref_cT = _reference_decode(token_seq, hidden, cell, params)
    assert outs.shape == (T, batch, output_size)
    assert jnp.allclose(outs, ref_outs, atol=2e-2)
    assert jnp.allclose(hT, ref_hT, atol=2e-2)
    assert jnp.allclose(cT, ref_cT, atol=2e-2)

    print("KERNEL_OK")
</pallas_src>

<mosaic_0001>
module attributes {stable_mosaic.version = 11 : i64} {
  func.func @_decoder_kernel(%arg0: i32, %arg1: memref<1x8x1xi32, #tpu.memory_space<vmem>>, %arg2: memref<32x32xbf16, #tpu.memory_space<vmem>>, %arg3: memref<2x8x32xf32, #tpu.memory_space<vmem>>, %arg4: memref<2x8x32xf32, #tpu.memory_space<vmem>>, %arg5: memref<2x64x128xbf16, #tpu.memory_space<vmem>>, %arg6: memref<2x1x128xf32, #tpu.memory_space<vmem>>, %arg7: memref<32x128xbf16, #tpu.memory_space<vmem>>, %arg8: memref<1x128xf32, #tpu.memory_space<vmem>>, %arg9: memref<1x8x128xf32, #tpu.memory_space<vmem>>, %arg10: memref<2x8x32xf32, #tpu.memory_space<vmem>>, %arg11: memref<2x8x32xf32, #tpu.memory_space<vmem>>, %arg12: memref<2x8x32xf32, #tpu.memory_space<vmem>>, %arg13: memref<2x8x32xf32, #tpu.memory_space<vmem>>) attributes {dimension_semantics = [#tpu.dimension_semantics<arbitrary>], iteration_bounds = array<i64: 1>, scalar_prefetch = 0 : i64, scratch_operands = 2 : i64, tpu.core_type = #tpu.core_type<tc>, window_params = [{transform_indices = @transform_0, window_bounds = array<i64: 1, 8, 1>}, {pipeline_mode = #tpu.pipeline_mode<synchronous>, transform_indices = @transform_1, window_bounds = array<i64: 32, 32>}, {pipeline_mode = #tpu.pipeline_mode<synchronous>, transform_indices = @transform_2, window_bounds = array<i64: 2, 8, 32>}, {pipeline_mode = #tpu.pipeline_mode<synchronous>, transform_indices = @transform_3, window_bounds = array<i64: 2, 8, 32>}, {pipeline_mode = #tpu.pipeline_mode<synchronous>, transform_indices = @transform_4, window_bounds = array<i64: 2, 64, 128>}, {pipeline_mode = #tpu.pipeline_mode<synchronous>, transform_indices = @transform_5, window_bounds = array<i64: 2, 1, 128>}, {pipeline_mode = #tpu.pipeline_mode<synchronous>, transform_indices = @transform_6, window_bounds = array<i64: 32, 128>}, {pipeline_mode = #tpu.pipeline_mode<synchronous>, transform_indices = @transform_7, window_bounds = array<i64: 1, 128>}, {transform_indices = @transform_8, window_bounds = array<i64: 1, 8, 128>}, {pipeline_mode = #tpu.pipeline_mode<synchronous>, transform_indices = @transform_9, window_bounds = array<i64: 2, 8, 32>}, {pipeline_mode = #tpu.pipeline_mode<synchronous>, transform_indices = @transform_10, window_bounds = array<i64: 2, 8, 32>}]} {
    %c0_i32 = arith.constant 0 : i32
    %0 = arith.cmpi eq, %arg0, %c0_i32 : i32
    %1 = arith.extui %0 : i1 to i32
    %c0_i32_0 = arith.constant 0 : i32
    %2 = arith.cmpi ne, %1, %c0_i32_0 : i32
    scf.if %2 {
      %c0_54 = arith.constant 0 : index
      %c0_55 = arith.constant 0 : index
      %c0_56 = arith.constant 0 : index
      %95 = vector.load %arg3[%c0_54, %c0_55, %c0_56] : memref<2x8x32xf32, #tpu.memory_space<vmem>>, vector<2x8x32xf32>
      %c0_57 = arith.constant 0 : index
      %c0_58 = arith.constant 0 : index
      %c0_59 = arith.constant 0 : index
      %96 = vector.load %arg12[%c0_57, %c0_58, %c0_59] : memref<2x8x32xf32, #tpu.memory_space<vmem>>, vector<2x8x32xf32>
      tpu.vector_store %arg12[%c0_57, %c0_58, %c0_59], %95 {strides = array<i32>} : memref<2x8x32xf32, #tpu.memory_space<vmem>>, vector<2x8x32xf32>,
      %c0_60 = arith.constant 0 : index
      %c0_61 = arith.constant 0 : index
      %c0_62 = arith.constant 0 : index
      %97 = vector.load %arg4[%c0_60, %c0_61, %c0_62] : memref<2x8x32xf32, #tpu.memory_space<vmem>>, vector<2x8x32xf32>
      %c0_63 = arith.constant 0 : index
      %c0_64 = arith.constant 0 : index
      %c0_65 = arith.constant 0 : index
      %98 = vector.load %arg13[%c0_63, %c0_64, %c0_65] : memref<2x8x32xf32, #tpu.memory_space<vmem>>, vector<2x8x32xf32>
      tpu.vector_store %arg13[%c0_63, %c0_64, %c0_65], %97 {strides = array<i32>} : memref<2x8x32xf32, #tpu.memory_space<vmem>>, vector<2x8x32xf32>,
    } else {
    }
    %c0 = arith.constant 0 : index
    %c0_1 = arith.constant 0 : index
    %c0_2 = arith.constant 0 : index
    %3 = vector.load %arg1[%c0, %c0_1, %c0_2] : memref<1x8x1xi32, #tpu.memory_space<vmem>>, vector<1x8x1xi32>
    %4 = vector.shape_cast %3 : vector<1x8x1xi32> to vector<8x1xi32>
    %5 = tpu.iota {dimensions = array<i32: 1>} : vector<8x32xi32>
    %6 = vector.broadcast %4 : vector<8x1xi32> to vector<8x32xi32>
    %7 = arith.cmpi eq, %5, %6 : vector<8x32xi32>
    %8 = arith.extui %7 : vector<8x32xi1> to vector<8x32xi32>
    %9 = arith.sitofp %8 : vector<8x32xi32> to vector<8x32xf32>
    %10 = arith.truncf %9 : vector<8x32xf32> to vector<8x32xbf16>
    %c0_3 = arith.constant 0 : index
    %c0_4 = arith.constant 0 : index
    %11 = vector.load %arg2[%c0_3, %c0_4] : memref<32x32xbf16, #tpu.memory_space<vmem>>, vector<32x32xbf16>
    %cst = arith.constant dense<0.000000e+00> : vector<8x32xf32>
    %12 = tpu.matmul %10, %11, %cst {dimension_numbers = #tpu.dot_dimension_numbers<[1], [0], [0], [1], [0, 0, 1, 1], [], []>} : vector<8x32xbf16>, vector<32x32xbf16>, vector<8x32xf32> -> vector<8x32xf32>
    %c0_5 = arith.constant 0 : index
    %c0_6 = arith.constant 0 : index
    %c0_7 = arith.constant 0 : index
    %13 = vector.load %arg12[%c0_5, %c0_6, %c0_7] : memref<2x8x32xf32, #tpu.memory_space<vmem>>, vector<1x8x32xf32>
    %14 = vector.shape_cast %13 : vector<1x8x32xf32> to vector<8x32xf32>
    %c0_8 = arith.constant 0 : index
    %c0_9 = arith.constant 0 : index
    %c0_10 = arith.constant 0 : index
    %15 = vector.load %arg13[%c0_8, %c0_9, %c0_10] : memref<2x8x32xf32, #tpu.memory_space<vmem>>, vector<1x8x32xf32>
    %16 = vector.shape_cast %15 : vector<1x8x32xf32> to vector<8x32xf32>
    %17 = tpu.concatenate %12, %14 in 1 : vector<8x32xf32>, vector<8x32xf32> -> vector<8x64xf32>
    %18 = arith.truncf %17 : vector<8x64xf32> to vector<8x64xbf16>
    %c0_11 = arith.constant 0 : index
    %c0_12 = arith.constant 0 : index
    %c0_13 = arith.constant 0 : index
    %19 = vector.load %arg5[%c0_11, %c0_12, %c0_13] : memref<2x64x128xbf16, #tpu.memory_space<vmem>>, vector<1x64x128xbf16>
    %20 = vector.shape_cast %19 : vector<1x64x128xbf16> to vector<64x128xbf16>
    %cst_14 = arith.constant dense<0.000000e+00> : vector<8x128xf32>
    %21 = tpu.matmul %18, %20, %cst_14 {dimension_numbers = #tpu.dot_dimension_numbers<[1], [0], [0], [1], [0, 0, 1, 1], [], []>} : vector<8x64xbf16>, vector<64x128xbf16>, vector<8x128xf32> -> vector<8x128xf32>
    %c0_15 = arith.constant 0 : index
    %c0_16 = arith.constant 0 : index
    %c0_17 = arith.constant 0 : index
    %22 = vector.load %arg6[%c0_15, %c0_16, %c0_17] : memref<2x1x128xf32, #tpu.memory_space<vmem>>, vector<1x1x128xf32>
    %23 = vector.shape_cast %22 : vector<1x1x128xf32> to vector<1x128xf32>
    %24 = vector.broadcast %23 : vector<1x128xf32> to vector<8x128xf32>
    %25 = arith.addf %21, %24 : vector<8x128xf32>
    %26 = vector.extract_strided_slice %25 {offsets = [0, 0], sizes = [8, 96], strides = [1, 1]} : vector<8x128xf32> to vector<8x96xf32>
    %27 = arith.negf %26 : vector<8x96xf32>
    %28 = math.exp %27 : vector<8x96xf32>
    %cst_18 = arith.constant 1.000000e+00 : f32
    %29 = vector.broadcast %cst_18 : f32 to vector<8x96xf32>
    %30 = arith.addf %29, %28 : vector<8x96xf32>
    %31 = arith.divf %29, %30 : vector<8x96xf32>
    %32 = vector.extract_strided_slice %31 {offsets = [0, 0], sizes = [8, 32], strides = [1, 1]} : vector<8x96xf32> to vector<8x32xf32>
    %33 = vector.extract_strided_slice %31 {offsets = [0, 32], sizes = [8, 32], strides = [1, 1]} : vector<8x96xf32> to vector<8x32xf32>
    %34 = vector.extract_strided_slice %31 {offsets = [0, 64], sizes = [8, 32], strides = [1, 1]} : vector<8x96xf32> to vector<8x32xf32>
    %35 = vector.extract_strided_slice %25 {offsets = [0, 96], sizes = [8, 32], strides = [1, 1]} : vector<8x128xf32> to vector<8x32xf32>
    %36 = math.tanh %35 : vector<8x32xf32>
    %37 = arith.mulf %33, %16 : vector<8x32xf32>
    %38 = arith.mulf %32, %36 : vector<8x32xf32>
    %39 = arith.addf %37, %38 : vector<8x32xf32>
    %40 = math.tanh %39 : vector<8x32xf32>
    %41 = arith.mulf %34, %40 : vector<8x32xf32>
    %c0_19 = arith.constant 0 : index
    %c0_20 = arith.constant 0 : index
    %c0_21 = arith.constant 0 : index
    %42 = vector.load %arg12[%c0_19, %c0_20, %c0_21] : memref<2x8x32xf32, #tpu.memory_space<vmem>>, vector<1x8x32xf32>
    %43 = vector.shape_cast %42 : vector<1x8x32xf32> to vector<8x32xf32>
    %44 = vector.shape_cast %41 : vector<8x32xf32> to vector<1x8x32xf32>
    tpu.vector_store %arg12[%c0_19, %c0_20, %c0_21], %44 {strides = array<i32>} : memref<2x8x32xf32, #tpu.memory_space<vmem>>, vector<1x8x32xf32>,
    %c0_22 = arith.constant 0 : index
    %c0_23 = arith.constant 0 : index
    %c0_24 = arith.constant 0 : index
    %45 = vector.load %arg13[%c0_22, %c0_23, %c0_24] : memref<2x8x32xf32, #tpu.memory_space<vmem>>, vector<1x8x32xf32>
    %46 = vector.shape_cast %45 : vector<1x8x32xf32> to vector<8x32xf32>
    %47 = vector.shape_cast %39 : vector<8x32xf32> to vector<1x8x32xf32>
    tpu.vector_store %arg13[%c0_22, %c0_23, %c0_24], %47 {strides = array<i32>} : memref<2x8x32xf32, #tpu.memory_space<vmem>>, vector<1x8x32xf32>,
    %c1 = arith.constant 1 : index
    %c0_25 = arith.constant 0 : index
    %c0_26 = arith.constant 0 : index
    %48 = vector.load %arg12[%c1, %c0_25, %c0_26] : memref<2x8x32xf32, #tpu.memory_space<vmem>>, vector<1x8x32xf32>
    %49 = vector.shape_cast %48 : vector<1x8x32xf32> to vector<8x32xf32>
    %c1_27 = arith.constant 1 : index
    %c0_28 = arith.constant 0 : index
    %c0_29 = arith.constant 0 : index
    %50 = vector.load %arg13[%c1_27, %c0_28, %c0_29] : memref<2x8x32xf32, #tpu.memory_space<vmem>>, vector<1x8x32xf32>
    %51 = vector.shape_cast %50 : vector<1x8x32xf32> to vector<8x32xf32>
    %52 = tpu.concatenate %41, %49 in 1 : vector<8x32xf32>, vector<8x32xf32> -> vector<8x64xf32>
    %53 = arith.truncf %52 : vector<8x64xf32> to vector<8x64xbf16>
    %c1_30 = arith.constant 1 : index
    %c0_31 = arith.constant 0 : index
    %c0_32 = arith.constant 0 : index
    %54 = vector.load %arg5[%c1_30, %c0_31, %c0_32] : memref<2x64x128xbf16, #tpu.memory_space<vmem>>, vector<1x64x128xbf16>
    %55 = vector.shape_cast %54 : vector<1x64x128xbf16> to vector<64x128xbf16>
    %cst_33 = arith.constant dense<0.000000e+00> : vector<8x128xf32>
    %56 = tpu.matmul %53, %55, %cst_33 {dimension_numbers = #tpu.dot_dimension_numbers<[1], [0], [0], [1], [0, 0, 1, 1], [], []>} : vector<8x64xbf16>, vector<64x128xbf16>, vector<8x128xf32> -> vector<8x128xf32>
    %c1_34 = arith.constant 1 : index
    %c0_35 = arith.constant 0 : index
    %c0_36 = arith.constant 0 : index
    %57 = vector.load %arg6[%c1_34, %c0_35, %c0_36] : memref<2x1x128xf32, #tpu.memory_space<vmem>>, vector<1x1x128xf32>
    %58 = vector.shape_cast %57 : vector<1x1x128xf32> to vector<1x128xf32>
    %59 = vector.broadcast %58 : vector<1x128xf32> to vector<8x128xf32>
    %60 = arith.addf %56, %59 : vector<8x128xf32>
    %61 = vector.extract_strided_slice %60 {offsets = [0, 0], sizes = [8, 96], strides = [1, 1]} : vector<8x128xf32> to vector<8x96xf32>
    %62 = arith.negf %61 : vector<8x96xf32>
    %63 = math.exp %62 : vector<8x96xf32>
    %cst_37 = arith.constant 1.000000e+00 : f32
    %64 = vector.broadcast %cst_37 : f32 to vector<8x96xf32>
    %65 = arith.addf %64, %63 : vector<8x96xf32>
    %66 = arith.divf %64, %65 : vector<8x96xf32>
    %67 = vector.extract_strided_slice %66 {offsets = [0, 0], sizes = [8, 32], strides = [1, 1]} : vector<8x96xf32> to vector<8x32xf32>
    %68 = vector.extract_strided_slice %66 {offsets = [0, 32], sizes = [8, 32], strides = [1, 1]} : vector<8x96xf32> to vector<8x32xf32>
    %69 = vector.extract_strided_slice %66 {offsets = [0, 64], sizes = [8, 32], strides = [1, 1]} : vector<8x96xf32> to vector<8x32xf32>
    %70 = vector.extract_strided_slice %60 {offsets = [0, 96], sizes = [8, 32], strides = [1, 1]} : vector<8x128xf32> to vector<8x32xf32>
    %71 = math.tanh %70 : vector<8x32xf32>
    %72 = arith.mulf %68, %51 : vector<8x32xf32>
    %73 = arith.mulf %67, %71 : vector<8x32xf32>
    %74 = arith.addf %72, %73 : vector<8x32xf32>
    %75 = math.tanh %74 : vector<8x32xf32>
    %76 = arith.mulf %69, %75 : vector<8x32xf32>
    %c1_38 = arith.constant 1 : index
    %c0_39 = arith.constant 0 : index
    %c0_40 = arith.constant 0 : index
    %77 = vector.load %arg12[%c1_38, %c0_39, %c0_40] : memref<2x8x32xf32, #tpu.memory_space<vmem>>, vector<1x8x32xf32>
    %78 = vector.shape_cast %77 : vector<1x8x32xf32> to vector<8x32xf32>
    %79 = vector.shape_cast %76 : vector<8x32xf32> to vector<1x8x32xf32>
    tpu.vector_store %arg12[%c1_38, %c0_39, %c0_40], %79 {strides = array<i32>} : memref<2x8x32xf32, #tpu.memory_space<vmem>>, vector<1x8x32xf32>,
    %c1_41 = arith.constant 1 : index
    %c0_42 = arith.constant 0 : index
    %c0_43 = arith.constant 0 : index
    %80 = vector.load %arg13[%c1_41, %c0_42, %c0_43] : memref<2x8x32xf32, #tpu.memory_space<vmem>>, vector<1x8x32xf32>
    %81 = vector.shape_cast %80 : vector<1x8x32xf32> to vector<8x32xf32>
    %82 = vector.shape_cast %74 : vector<8x32xf32> to vector<1x8x32xf32>
    tpu.vector_store %arg13[%c1_41, %c0_42, %c0_43], %82 {strides = array<i32>} : memref<2x8x32xf32, #tpu.memory_space<vmem>>, vector<1x8x32xf32>,
    %83 = arith.truncf %76 : vector<8x32xf32> to vector<8x32xbf16>
    %c0_44 = arith.constant 0 : index
    %c0_45 = arith.constant 0 : index
    %84 = vector.load %arg7[%c0_44, %c0_45] : memref<32x128xbf16, #tpu.memory_space<vmem>>, vector<32x128xbf16>
    %cst_46 = arith.constant dense<0.000000e+00> : vector<8x128xf32>
    %85 = tpu.matmul %83, %84, %cst_46 {dimension_numbers = #tpu.dot_dimension_numbers<[1], [0], [0], [1], [0, 0, 1, 1], [], []>} : vector<8x32xbf16>, vector<32x128xbf16>, vector<8x128xf32> -> vector<8x128xf32>
    %c0_47 = arith.constant 0 : index
    %c0_48 = arith.constant 0 : index
    %86 = vector.load %arg8[%c0_47, %c0_48] : memref<1x128xf32, #tpu.memory_space<vmem>>, vector<1x128xf32>
    %87 = vector.broadcast %86 : vector<1x128xf32> to vector<8x128xf32>
    %88 = arith.addf %85, %87 : vector<8x128xf32>
    %c0_49 = arith.constant 0 : index
    %c0_50 = arith.constant 0 : index
    %c0_51 = arith.constant 0 : index
    %89 = vector.load %arg9[%c0_49, %c0_50, %c0_51] : memref<1x8x128xf32, #tpu.memory_space<vmem>>, vector<1x8x128xf32>
    %90 = vector.shape_cast %89 : vector<1x8x128xf32> to vector<8x128xf32>
    %91 = vector.shape_cast %88 : vector<8x128xf32> to vector<1x8x128xf32>
    tpu.vector_store %arg9[%c0_49, %c0_50, %c0_51], %91 {strides = array<i32>} : memref<1x8x128xf32, #tpu.memory_space<vmem>>, vector<1x8x128xf32>,
    %c0_i32_52 = arith.constant 0 : i32
    %92 = arith.cmpi eq, %arg0, %c0_i32_52 : i32
    %93 = arith.extui %92 : i1 to i32
    %c0_i32_53 = arith.constant 0 : i32
    %94 = arith.cmpi ne, %93, %c0_i32_53 : i32
    scf.if %94 {
      %c0_54 = arith.constant 0 : index
      %c0_55 = arith.constant 0 : index
      %c0_56 = arith.constant 0 : index
      %95 = vector.load %arg12[%c0_54, %c0_55, %c0_56] : memref<2x8x32xf32, #tpu.memory_space<vmem>>, vector<2x8x32xf32>
      %c0_57 = arith.constant 0 : index
      %c0_58 = arith.constant 0 : index
      %c0_59 = arith.constant 0 : index
      %96 = vector.load %arg10[%c0_57, %c0_58, %c0_59] : memref<2x8x32xf32, #tpu.memory_space<vmem>>, vector<2x8x32xf32>
      tpu.vector_store %arg10[%c0_57, %c0_58, %c0_59], %95 {strides = array<i32>} : memref<2x8x32xf32, #tpu.memory_space<vmem>>, vector<2x8x32xf32>,
      %c0_60 = arith.constant 0 : index
      %c0_61 = arith.constant 0 : index
      %c0_62 = arith.constant 0 : index
      %97 = vector.load %arg13[%c0_60, %c0_61, %c0_62] : memref<2x8x32xf32, #tpu.memory_space<vmem>>, vector<2x8x32xf32>
      %c0_63 = arith.constant 0 : index
      %c0_64 = arith.constant 0 : index
      %c0_65 = arith.constant 0 : index
      %98 = vector.load %arg11[%c0_63, %c0_64, %c0_65] : memref<2x8x32xf32, #tpu.memory_space<vmem>>, vector<2x8x32xf32>
      tpu.vector_store %arg11[%c0_63, %c0_64, %c0_65], %97 {strides = array<i32>} : memref<2x8x32xf32, #tpu.memory_space<vmem>>, vector<2x8x32xf32>,
    } else {
    }
    return
  }
  func.func @transform_0(%arg0: i32) -> (i32, i32, i32) {
    %c0_i32 = arith.constant 0 : i32
    %c0_i32_0 = arith.constant 0 : i32
    %c0_i32_1 = arith.constant 0 : i32
    return %arg0, %c0_i32, %c0_i32_0 : i32, i32, i32
  }
  func.func @transform_1(%arg0: i32) -> (i32, i32) {
    %c0_i32 = arith.constant 0 : i32
    %c0_i32_0 = arith.constant 0 : i32
    %c0_i32_1 = arith.constant 0 : i32
    return %c0_i32, %c0_i32_0 : i32, i32
  }
  func.func @transform_2(%arg0: i32) -> (i32, i32, i32) {
    %c0_i32 = arith.constant 0 : i32
    %c0_i32_0 = arith.constant 0 : i32
    %c0_i32_1 = arith.constant 0 : i32
    %c0_i32_2 = arith.constant 0 : i32
    return %c0_i32, %c0_i32_0, %c0_i32_1 : i32, i32, i32
  }
  func.func @transform_3(%arg0: i32) -> (i32, i32, i32) {
    %c0_i32 = arith.constant 0 : i32
    %c0_i32_0 = arith.constant 0 : i32
    %c0_i32_1 = arith.constant 0 : i32
    %c0_i32_2 = arith.constant 0 : i32
    return %c0_i32, %c0_i32_0, %c0_i32_1 : i32, i32, i32
  }
  func.func @transform_4(%arg0: i32) -> (i32, i32, i32) {
    %c0_i32 = arith.constant 0 : i32
    %c0_i32_0 = arith.constant 0 : i32
    %c0_i32_1 = arith.constant 0 : i32
    %c0_i32_2 = arith.constant 0 : i32
    return %c0_i32, %c0_i32_0, %c0_i32_1 : i32, i32, i32
  }
  func.func @transform_5(%arg0: i32) -> (i32, i32, i32) {
    %c0_i32 = arith.constant 0 : i32
    %c0_i32_0 = arith.constant 0 : i32
    %c0_i32_1 = arith.constant 0 : i32
    %c0_i32_2 = arith.constant 0 : i32
    return %c0_i32, %c0_i32_0, %c0_i32_1 : i32, i32, i32
  }
  func.func @transform_6(%arg0: i32) -> (i32, i32) {
    %c0_i32 = arith.constant 0 : i32
    %c0_i32_0 = arith.constant 0 : i32
    %c0_i32_1 = arith.constant 0 : i32
    return %c0_i32, %c0_i32_0 : i32, i32
  }
  func.func @transform_7(%arg0: i32) -> (i32, i32) {
    %c0_i32 = arith.constant 0 : i32
    %c0_i32_0 = arith.constant 0 : i32
    %c0_i32_1 = arith.constant 0 : i32
    return %c0_i32, %c0_i32_0 : i32, i32
  }
  func.func @transform_8(%arg0: i32) -> (i32, i32, i32) {
    %c0_i32 = arith.constant 0 : i32
    %c0_i32_0 = arith.constant 0 : i32
    %c0_i32_1 = arith.constant 0 : i32
    return %arg0, %c0_i32, %c0_i32_0 : i32, i32, i32
  }
  func.func @transform_9(%arg0: i32) -> (i32, i32, i32) {
    %c0_i32 = arith.constant 0 : i32
    %c0_i32_0 = arith.constant 0 : i32
    %c0_i32_1 = arith.constant 0 : i32
    %c0_i32_2 = arith.constant 0 : i32
    return %c0_i32, %c0_i32_0, %c0_i32_1 : i32, i32, i32
  }
  func.func @transform_10(%arg0: i32) -> (i32, i32, i32) {
    %c0_i32 = arith.constant 0 : i32
    %c0_i32_0 = arith.constant 0 : i32
    %c0_i32_1 = arith.constant 0 : i32
    %c0_i32_2 = arith.constant 0 : i32
    return %c0_i32, %c0_i32_0, %c0_i32_1 : i32, i32, i32
  }
}

</mosaic_0001>

<llo_original>
// kernel: decoder_decode.1
$region0: #{decoder_decode.1}
  #allocation0 [shape = 'u32[]', space=smem, size = 0x4, offset = 0x4, fixed_abs, tag = 'smem constant byte address 0x4 - core index']
  #allocation1 [shape = 'u32[72,128]{1,0:T(1,128)}', space=vmem, size = 0x9000, scoped, tag = 'internal scratch']
  #allocation2 [shape = 'f32[2,8,32]{2,1,0:T(8,128)}', space=vmem, size = 0x2000, scoped, tag = 'scratch operand']
  #allocation3 [shape = 'f32[2,8,32]{2,1,0:T(8,128)}', space=vmem, size = 0x2000, scoped, tag = 'scratch operand']
  %s0 = inlined_call_operand.vmem [shape: s32[1,8,1], index: 0, kind: input, shape index: {}]
  %s1 = inlined_call_operand.hbm [shape: bf16[32,32], index: 1, kind: input, shape index: {}]
  %s2 = inlined_call_operand.hbm [shape: f32[2,8,32], index: 2, kind: input, shape index: {}]
  %s3 = inlined_call_operand.hbm [shape: f32[2,8,32], index: 3, kind: input, shape index: {}]
  %s4 = inlined_call_operand.hbm [shape: bf16[2,64,128], index: 4, kind: input, shape index: {}]
  %s5 = inlined_call_operand.hbm [shape: f32[2,1,128], index: 5, kind: input, shape index: {}]
  %s6 = inlined_call_operand.vmem [shape: bf16[32,128], index: 6, kind: input, shape index: {}]
  %s7 = inlined_call_operand.hbm [shape: f32[1,128], index: 7, kind: input, shape index: {}]
  %s8 = inlined_call_operand.hbm [shape: f32[1,8,128], index: 8, kind: output, shape index: {0}]
  %s9 = inlined_call_operand.hbm [shape: f32[2,8,32], index: 9, kind: output, shape index: {1}]
  %s10 = inlined_call_operand.hbm [shape: f32[2,8,32], index: 10, kind: output, shape index: {2}]
  %11 = xla_tuple %s8, %s9, %s10
  %s12 = sld [smem:[#allocation0]]
  $region90: #{decoder_decode.1} parent=0
    _
  %s14 = ssub.s32 1, %s12
  %s15 = scalar_select 0, %s14, %s12
  $region1: #{decoder_decode.1} parent=0
    #allocation4 [shape = 'u8[8192]{0}', space=vmem, size = 0x2000, scoped, tag = 'input window, operand 1, single buffered']
    #allocation5 [shape = 's32[1]{0}', space=sflag, size = 0x4, scoped, tag = 'scoped memory for decoder_decode.1']
    #allocation6 [shape = 's32[1]{0}', space=sflag, size = 0x4, scoped, tag = 'scoped memory for decoder_decode.1']
    #allocation7 [shape = 'u8[8192]{0}', space=vmem, size = 0x2000, scoped, tag = 'input window, operand 2, single buffered']
    #allocation8 [shape = 's32[1]{0}', space=sflag, size = 0x4, scoped, tag = 'scoped memory for decoder_decode.1']
    #allocation9 [shape = 'u8[8192]{0}', space=vmem, size = 0x2000, scoped, tag = 'input window, operand 3, single buffered']
    #allocation10 [shape = 'u8[32768]{0}', space=vmem, size = 0x8000, scoped, tag = 'input window, operand 4, single buffered']
    #allocation11 [shape = 's32[1]{0}', space=sflag, size = 0x4, scoped, tag = 'scoped memory for decoder_decode.1']
    #allocation12 [shape = 'u8[1024]{0}', space=vmem, size = 0x400, scoped, tag = 'input window, operand 5, single buffered']
    #allocation13 [shape = 'u8[512]{0}', space=vmem, size = 0x400, scoped, tag = 'input window, operand 7, single buffered']
    #allocation14 [shape = 's32[1]{0}', space=sflag, size = 0x4, scoped, tag = 'scoped memory for decoder_decode.1']
    #allocation15 [shape = 'u8[4096]{0}', space=vmem, size = 0x1000, scoped, tag = 'output window, operand 0, single buffered']
    #allocation16 [shape = 'u8[8192]{0}', space=vmem, size = 0x2000, scoped, tag = 'output window, operand 1, single buffered']
    #allocation17 [shape = 's32[1]{0}', space=sflag, size = 0x4, scoped, tag = 'scoped memory for decoder_decode.1']
    #allocation18 [shape = 'u8[8192]{0}', space=vmem, size = 0x2000, scoped, tag = 'output window, operand 2, single buffered']
    %16 = vsyncpa [#allocation5], 0
    %17 = vsyncpa [#allocation8], 0
    %18 = vsyncpa [#allocation11], 0
    %19 = vsyncpa [#allocation14], 0
    %20 = vsyncpa [#allocation6], 0
    %21 = vsyncpa [#allocation17], 0
    // Predicated region
    $region2: #{decoder_decode.1} parent=1 // pred_check
      _
    $region3: #{decoder_decode.1} parent=1 // pred_check_branch
      %23 = sbr.rel (0) target = $region5
    $region4: #{decoder_decode.1} parent=1 // pred_region
      _
    $region5: #{decoder_decode.1} parent=1 // pred_fallthru
      _
    // Predicated region
    $region6: #{decoder_decode.1} parent=1 // pred_check
      _
    $region7: #{decoder_decode.1} parent=1 // pred_check_branch
      %25 = sbr.rel (0) target = $region9
    $region8: #{decoder_decode.1} parent=1 // pred_region
      %27 = vsyncadd [#allocation5], 0
      %s28 = sshll.u32 %s1, 4
      %s29 = int_to_ptr.hbm [resolvable:$true] %s28
      %s30 = sshll.u32 [#allocation4], 4
      %s31 = int_to_ptr.vmem [resolvable:$true] %s30
      %36 = dma.hbm_to_vmem [thread:$0]  %s29, 256, %s31, [#allocation5], 64, 64, 4
    $region9: #{decoder_decode.1} parent=1 // pred_fallthru
      _
    // Predicated region
    $region10: #{decoder_decode.1} parent=1 // pred_check
      _
    $region11: #{decoder_decode.1} parent=1 // pred_check_branch
      %38 = sbr.rel (0) target = $region13
    $region12: #{decoder_decode.1} parent=1 // pred_region
      %40 = vsyncadd [#allocation8], 0
      %s41 = sshll.u32 %s2, 4
      %s42 = int_to_ptr.hbm [resolvable:$true] %s41
      %s43 = sshll.u32 [#allocation7], 4
      %s44 = int_to_ptr.vmem [resolvable:$true] %s43
      %49 = dma.hbm_to_vmem [thread:$0]  %s42, 256, %s44, [#allocation8], 128, 128, 8
    $region13: #{decoder_decode.1} parent=1 // pred_fallthru
      _
    // Predicated region
    $region14: #{decoder_decode.1} parent=1 // pred_check
      _
    $region15: #{decoder_decode.1} parent=1 // pred_check_branch
      %51 = sbr.rel (0) target = $region17
    $region16: #{decoder_decode.1} parent=1 // pred_region
      %53 = vsyncadd [#allocation8], 0
      %s54 = sshll.u32 %s3, 4
      %s55 = int_to_ptr.hbm [resolvable:$true] %s54
      %s56 = sshll.u32 [#allocation9], 4
      %s57 = int_to_ptr.vmem [resolvable:$true] %s56
      %62 = dma.hbm_to_vmem [thread:$0]  %s55, 256, %s57, [#allocation8], 128, 128, 8
    $region17: #{decoder_decode.1} parent=1 // pred_fallthru
      _
    // Predicated region
    $region18: #{decoder_decode.1} parent=1 // pred_check
      _
    $region19: #{decoder_decode.1} parent=1 // pred_check_branch
      %64 = sbr.rel (0) target = $region21
    $region20: #{decoder_decode.1} parent=1 // pred_region
      %66 = vsyncadd [#allocation11], 0
      %s67 = sshll.u32 %s4, 4
      %s68 = int_to_ptr.hbm [resolvable:$true] %s67
      %s69 = sshll.u32 [#allocation10], 4
      %s70 = int_to_ptr.vmem [resolvable:$true] %s69
      %75 = dma.hbm_to_vmem [thread:$0]  %s68, 1024, %s70, [#allocation11], 64, 64, 4
    $region21: #{decoder_decode.1} parent=1 // pred_fallthru
      _
    // Predicated region
    $region22: #{decoder_decode.1} parent=1 // pred_check
      _
    $region23: #{decoder_decode.1} parent=1 // pred_check_branch
      %77 = sbr.rel (0) target = $region25
    $region24: #{decoder_decode.1} parent=1 // pred_region
      %79 = vsyncadd [#allocation11], 0
      %s80 = sshll.u32 %s5, 4
      %s81 = int_to_ptr.hbm [resolvable:$true] %s80
      %s82 = sshll.u32 [#allocation12], 4
      %s83 = int_to_ptr.vmem [resolvable:$true] %s82
      %88 = dma.hbm_to_vmem [thread:$0]  %s81, 32, %s83, [#allocation11], 16, 16, 1
    $region25: #{decoder_decode.1} parent=1 // pred_fallthru
      _
    // Predicated region
    $region26: #{decoder_decode.1} parent=1 // pred_check
      _
    $region27: #{decoder_decode.1} parent=1 // pred_check_branch
      %90 = sbr.rel (0) target = $region29
    $region28: #{decoder_decode.1} parent=1 // pred_region
      _
    $region29: #{decoder_decode.1} parent=1 // pred_fallthru
      _
    // Predicated region
    $region30: #{decoder_decode.1} parent=1 // pred_check
      _
    $region31: #{decoder_decode.1} parent=1 // pred_check_branch
      %92 = sbr.rel (0) target = $region33
    $region32: #{decoder_decode.1} parent=1 // pred_region
      %94 = vsyncadd [#allocation14], 0
      %s96 = sshll.u32 %s7, 4
      %s97 = int_to_ptr.hbm [resolvable:$true] %s96
      %s98 = sshll.u32 [#allocation13], 4
      %s99 = int_to_ptr.vmem [resolvable:$true] %s98
      %101 = dma.hbm_to_vmem [thread:$0]  %s97, 16, %s99, [#allocation14]
    $region33: #{decoder_decode.1} parent=1 // pred_fallthru
      _
    // Predicated region
    $region34: #{decoder_decode.1} parent=1 // pred_check
      _
    $region35: #{decoder_decode.1} parent=1 // pred_check_branch
      %103 = sbr.rel (0) target = $region37
    $region36: #{decoder_decode.1} parent=1 // pred_region
      %105 = dma.done [#allocation5], 256
    $region37: #{decoder_decode.1} parent=1 // pred_fallthru
      _
    // Predicated region
    $region38: #{decoder_decode.1} parent=1 // pred_check
      _
    $region39: #{decoder_decode.1} parent=1 // pred_check_branch
      %107 = sbr.rel (0) target = $region41
    $region40: #{decoder_decode.1} parent=1 // pred_region
      %109 = dma.done [#allocation8], 256
    $region41: #{decoder_decode.1} parent=1 // pred_fallthru
      _
    // Predicated region
    $region42: #{decoder_decode.1} parent=1 // pred_check
      _
    $region43: #{decoder_decode.1} parent=1 // pred_check_branch
      %111 = sbr.rel (0) target = $region45
    $region44: #{decoder_decode.1} parent=1 // pred_region
      %113 = dma.done [#allocation8], 256
    $region45: #{decoder_decode.1} parent=1 // pred_fallthru
      _
    // Predicated region
    $region46: #{decoder_decode.1} parent=1 // pred_check
      _
    $region47: #{decoder_decode.1} parent=1 // pred_check_branch
      %115 = sbr.rel (0) target = $region49
    $region48: #{decoder_decode.1} parent=1 // pred_region
      %117 = dma.done [#allocation11], 1024
    $region49: #{decoder_decode.1} parent=1 // pred_fallthru
      _
    // Predicated region
    $region50: #{decoder_decode.1} parent=1 // pred_check
      _
    $region51: #{decoder_decode.1} parent=1 // pred_check_branch
      %119 = sbr.rel (0) target = $region53
    $region52: #{decoder_decode.1} parent=1 // pred_region
      %121 = dma.done [#allocation11], 32
    $region53: #{decoder_decode.1} parent=1 // pred_fallthru
      _
    // Predicated region
    $region54: #{decoder_decode.1} parent=1 // pred_check
      _
    $region55: #{decoder_decode.1} parent=1 // pred_check_branch
      %123 = sbr.rel (0) target = $region57
    $region56: #{decoder_decode.1} parent=1 // pred_region
      %125 = dma.done [#allocation14], 16
    $region57: #{decoder_decode.1} parent=1 // pred_fallthru
      _
    %p127 = scmp.eq.s32.totalorder 0, 0
    // Predicated region
    $region58: #{decoder_decode.1} parent=1 // pred_check
      %p128 = pneg %p127
    $region59: #{decoder_decode.1} parent=1 // pred_check_branch
      %130 = sbr.rel (%p128) target = $region61
    $region60: #{decoder_decode.1} parent=1 // pred_region
      %v131 = vld [vmem:[#allocation7] sm:$0xff]
      %v132 = vld [vmem:[#allocation7 + $0x8] sm:$0xff]
      %vm133 = vcmask 261120
      %134 = vst.msk [vmem:[#allocation2] sm:$0xff] %vm133, %v131
      %135 = vst.msk [vmem:[#allocation2 + $0x8] sm:$0xff] %vm133, %v132
      %v136 = vld [vmem:[#allocation9] sm:$0xff]
      %v137 = vld [vmem:[#allocation9 + $0x8] sm:$0xff]
      %138 = vst.msk [vmem:[#allocation3] sm:$0xff] %vm133, %v136
      %139 = vst.msk [vmem:[#allocation3 + $0x8] sm:$0xff] %vm133, %v137
    $region61: #{decoder_decode.1} parent=1 // pred_fallthru
      _
    %v140 = vld [vmem:[%s0] sm:$0xff]
    %v141 = vlaneseq
    %v142 = vand.u32 %v141, 127
    %143 = vset.pattern.permute.xlu0 0
    %144 = vperm.xlu0 %143, %v140
    %v145 = vpop.permute.xlu0 %144
    %vm146 = vcmp.eq.s32.totalorder %v142, %v145
    %v147 = vsel %vm146, 1, 0
    %v148 = vcvt.s32.f32 %v147
    %v149 = vpack.c.bf16 %v148, %v148
    %v150 = vld [vmem:[#allocation4] sm:$0xf]
    %v151 = vld [vmem:[#allocation4 + $0x4] sm:$0xf]
    %v152 = vld [vmem:[#allocation4 + $0x8] sm:$0xf]
    %v153 = vld [vmem:[#allocation4 + $0xc] sm:$0xf]
    %v158 = vunpack.c.l.b16 %v150
    %v159 = vunpack.c.l.b16 %v151
    %v160 = vunpack.c.l.b16 %v152
    %v161 = vunpack.c.l.b16 %v153
    %v162 = vpack.c.b16 %v159, %v158
    %v163 = vpack.c.b16 %v161, %v160
    %vm166 = vcmask 261120
    %v168 = vsel %vm166, %v149, 0
    %170 = vmatpush.bf16.msra.mxu0 0
    %171 = vmatpush.bf16.msra.mxu0 0
    %172 = vmatpush.bf16.msra.mxu0 0
    %173 = vmatpush.bf16.msra.mxu0 0
    %174 = vmatpush.bf16.msra.mxu0 0
    %175 = vmatpush.bf16.msra.mxu0 0
    %176 = vmatpush.bf16.msra.mxu0 %v163
    %177 = vmatpush.bf16.msra.mxu0 %v162
    %178 = vmatmul.bf16.gmra.mxu0 %v168
    %v179 = vpop.f32.mrf.mxu0
    %v180 = vadd.f32 0.0, %v179
    %v181 = vpop.f32.mrf.mxu0
    %182 = vdwg.mxu0
    %v183 = vld [vmem:[#allocation2] sm:$0xff]
    %v184 = vld [vmem:[#allocation3] sm:$0xff]
    %186 = vrot.lane.b32.xlu0 %v183, 32
    %v187 = vpop.permute.xlu0 %186
    %v189 = vsel %vm166, %v180, %v187
    %v190 = vpack.c.bf16 %v189, %v189
    %v191 = vld [vmem:[#allocation10] sm:$0xf]
    %v192 = vld [vmem:[#allocation10 + $0x4] sm:$0xf]
    %v193 = vld [vmem:[#allocation10 + $0x8] sm:$0xf]
    %v194 = vld [vmem:[#allocation10 + $0xc] sm:$0xf]
    %v195 = vld [vmem:[#allocation10 + $0x10] sm:$0xf]
    %v196 = vld [vmem:[#allocation10 + $0x14] sm:$0xf]
    %v197 = vld [vmem:[#allocation10 + $0x18] sm:$0xf]
    %v198 = vld [vmem:[#allocation10 + $0x1c] sm:$0xf]
    %v199 = vld [vmem:[#allocation12] sm:$0x1]
    %v201 = vperm.slane %v199, 0
    %v211 = vunpack.c.l.b16 %v191
    %v212 = vunpack.c.l.b16 %v192
    %v213 = vunpack.c.l.b16 %v193
    %v214 = vunpack.c.l.b16 %v194
    %v215 = vunpack.c.l.b16 %v195
    %v216 = vunpack.c.l.b16 %v196
    %v217 = vunpack.c.l.b16 %v197
    %v218 = vunpack.c.l.b16 %v198
    %v219 = vpack.c.b16 %v212, %v211
    %v220 = vpack.c.b16 %v214, %v213
    %v221 = vpack.c.b16 %v216, %v215
    %v222 = vpack.c.b16 %v218, %v217
    %vm227 = vcmask 523264
    %v229 = vsel %vm227, %v190, 0
    %231 = vmatpush.bf16.msra.mxu0 0
    %232 = vmatpush.bf16.msra.mxu0 0
    %233 = vmatpush.bf16.msra.mxu0 0
    %234 = vmatpush.bf16.msra.mxu0 0
    %235 = vmatpush.bf16.msra.mxu0 %v222
    %236 = vmatpush.bf16.msra.mxu0 %v221
    %237 = vmatpush.bf16.msra.mxu0 %v220
    %238 = vmatpush.bf16.msra.mxu0 %v219
    %239 = vmatmul.bf16.gmra.mxu0 %v229
    %v240 = vpop.f32.mrf.mxu0
    %v241 = vadd.f32 %v201, %v240
    %v242 = vpop.f32.mrf.mxu0
    %243 = vdwg.mxu0
    %v244 = vxor.u32 %v241, 2147483648
    %v245 = vmul.f32 %v244, 1.442695
    %v246 = vpow.pop %v245
    %v247 = vadd.f32 %v246, 1.0
    %v248 = vrcp.pop %v247
    %v249 = vmul.f32 %v247, %v248
    %v250 = vsub.f32 1.0, %v249
    %v251 = vmul.f32 %v248, %v250
    %v252 = vadd.f32 %v248, %v251
    %vm253 = vweird.f32 %v247
    %vm254 = vweird.f32 %v248
    %vm255 = vmor %vm253, %vm254
    %v256 = vsel %vm255, %v248, %v252
    %v257 = vand.u32 2147483647, %v247
    %vm258 = vcmp.eq.f32.partialorder %v257, 8.507059e+37
    %v259 = vand.u32 %v247, 2147483648
    %v260 = vor.u32 1.1754944e-38, %v259
    %v261 = vsel %vm258, %v260, %v256
    %v262 = vmul.f32 1.0, %v261
    %v263 = vtanh.pop %v241
    %265 = vrot.lane.b32.xlu0 %v184, 32
    %v266 = vpop.permute.xlu0 %265
    %v268 = vmul.f32 %v262, %v266
    %270 = vrot.lane.b32.xlu0 %v263, 32
    %v271 = vpop.permute.xlu0 %270
    %v273 = vmul.f32 %v262, %v271
    %275 = vrot.lane.b32.xlu0 %v273, 32
    %v276 = vpop.permute.xlu0 %275
    %v278 = vadd.f32 %v268, %v276
    %v279 = vtanh.pop %v278
    %281 = vrot.lane.b32.xlu0 %v279, 32
    %v282 = vpop.permute.xlu0 %281
    %v284 = vmul.f32 %v262, %v282
    %286 = vrot.lane.b32.xlu0 %v284, 64
    %v287 = vpop.permute.xlu0 %286
    %289 = vst.msk [vmem:[#allocation2] sm:$0xff] %vm166, %v287
    %291 = vrot.lane.b32.xlu0 %v278, 96
    %v292 = vpop.permute.xlu0 %291
    %294 = vst.msk [vmem:[#allocation3] sm:$0xff] %vm166, %v292
    %s295 = scalar_lea.vmem [#allocation2], 8
    %v296 = vld [vmem:[%s295] sm:$0xff]
    %s297 = scalar_lea.vmem [#allocation3], 8
    %v298 = vld [vmem:[%s297] sm:$0xff]
    %300 = vrot.lane.b32.xlu0 %v296, 32
    %v301 = vpop.permute.xlu0 %300
    %v303 = vsel %vm166, %v287, %v301
    %v304 = vpack.c.bf16 %v303, %v303
    %s305 = scalar_lea.vmem [#allocation10], 32
    %v306 = vld [vmem:[%s305] sm:$0xf]
    %v307 = vld [vmem:[%s305 + $0x4] sm:$0xf]
    %v308 = vld [vmem:[%s305 + $0x8] sm:$0xf]
    %v309 = vld [vmem:[%s305 + $0xc] sm:$0xf]
    %v310 = vld [vmem:[%s305 + $0x10] sm:$0xf]
    %v311 = vld [vmem:[%s305 + $0x14] sm:$0xf]
    %v312 = vld [vmem:[%s305 + $0x18] sm:$0xf]
    %v313 = vld [vmem:[%s305 + $0x1c] sm:$0xf]
    %s314 = scalar_lea.vmem [#allocation12], 1
    %v315 = vld [vmem:[%s314] sm:$0x1]
    %v317 = vperm.slane %v315, 0
    %v327 = vunpack.c.l.b16 %v306
    %v328 = vunpack.c.l.b16 %v307
    %v329 = vunpack.c.l.b16 %v308
    %v330 = vunpack.c.l.b16 %v309
    %v331 = vunpack.c.l.b16 %v310
    %v332 = vunpack.c.l.b16 %v311
    %v333 = vunpack.c.l.b16 %v312
    %v334 = vunpack.c.l.b16 %v313
    %v335 = vpack.c.b16 %v328, %v327
    %v336 = vpack.c.b16 %v330, %v329
    %v337 = vpack.c.b16 %v332, %v331
    %v338 = vpack.c.b16 %v334, %v333
    %v344 = vsel %vm227, %v304, 0
    %346 = vmatpush.bf16.msra.mxu0 0
    %347 = vmatpush.bf16.msra.mxu0 0
    %348 = vmatpush.bf16.msra.mxu0 0
    %349 = vmatpush.bf16.msra.mxu0 0
    %350 = vmatpush.bf16.msra.mxu0 %v338
    %351 = vmatpush.bf16.msra.mxu0 %v337
    %352 = vmatpush.bf16.msra.mxu0 %v336
    %353 = vmatpush.bf16.msra.mxu0 %v335
    %354 = vmatmul.bf16.gmra.mxu0 %v344
    %v355 = vpop.f32.mrf.mxu0
    %v356 = vadd.f32 %v317, %v355
    %v357 = vpop.f32.mrf.mxu0
    %358 = vdwg.mxu0
    %v359 = vxor.u32 %v356, 2147483648
    %v360 = vmul.f32 %v359, 1.442695
    %v361 = vpow.pop %v360
    %v362 = vadd.f32 %v361, 1.0
    %v363 = vrcp.pop %v362
    %v364 = vmul.f32 %v362, %v363
    %v365 = vsub.f32 1.0, %v364
    %v366 = vmul.f32 %v363, %v365
    %v367 = vadd.f32 %v363, %v366
    %vm368 = vweird.f32 %v362
    %vm369 = vweird.f32 %v363
    %vm370 = vmor %vm368, %vm369
    %v371 = vsel %vm370, %v363, %v367
    %v372 = vand.u32 2147483647, %v362
    %vm373 = vcmp.eq.f32.partialorder %v372, 8.507059e+37
    %v374 = vand.u32 %v362, 2147483648
    %v375 = vor.u32 1.1754944e-38, %v374
    %v376 = vsel %vm373, %v375, %v371
    %v377 = vmul.f32 1.0, %v376
    %v378 = vtanh.pop %v356
    %380 = vrot.lane.b32.xlu0 %v298, 32
    %v381 = vpop.permute.xlu0 %380
    %v383 = vmul.f32 %v377, %v381
    %385 = vrot.lane.b32.xlu0 %v378, 32
    %v386 = vpop.permute.xlu0 %385
    %v388 = vmul.f32 %v377, %v386
    %390 = vrot.lane.b32.xlu0 %v388, 32
    %v391 = vpop.permute.xlu0 %390
    %v393 = vadd.f32 %v383, %v391
    %v394 = vtanh.pop %v393
    %396 = vrot.lane.b32.xlu0 %v394, 32
    %v397 = vpop.permute.xlu0 %396
    %v399 = vmul.f32 %v377, %v397
    %401 = vrot.lane.b32.xlu0 %v399, 64
    %v402 = vpop.permute.xlu0 %401
    %404 = vst.msk [vmem:[%s295] sm:$0xff] %vm166, %v402
    %406 = vrot.lane.b32.xlu0 %v393, 96
    %v407 = vpop.permute.xlu0 %406
    %409 = vst.msk [vmem:[%s297] sm:$0xff] %vm166, %v407
    %v410 = vpack.c.bf16 %v399, %v399
    %v411 = vld [vmem:[%s6] sm:$0xf]
    %v412 = vld [vmem:[%s6 + $0x4] sm:$0xf]
    %v413 = vld [vmem:[%s6 + $0x8] sm:$0xf]
    %v414 = vld [vmem:[%s6 + $0xc] sm:$0xf]
    %v415 = vld [vmem:[#allocation13] sm:$0x1]
    %v417 = vperm.slane %v415, 0
    %420 = vrot.lane.b32.xlu0 %v410, 64
    %v421 = vpop.permute.xlu0 %420
    %v426 = vunpack.c.l.b16 %v411
    %v427 = vunpack.c.l.b16 %v412
    %v428 = vunpack.c.l.b16 %v413
    %v429 = vunpack.c.l.b16 %v414
    %v430 = vpack.c.b16 %v427, %v426
    %v431 = vpack.c.b16 %v429, %v428
    %v435 = vsel %vm166, %v421, 0
    %437 = vmatpush.bf16.msra.mxu0 0
    %438 = vmatpush.bf16.msra.mxu0 0
    %439 = vmatpush.bf16.msra.mxu0 0
    %440 = vmatpush.bf16.msra.mxu0 0
    %441 = vmatpush.bf16.msra.mxu0 0
    %442 = vmatpush.bf16.msra.mxu0 0
    %443 = vmatpush.bf16.msra.mxu0 %v431
    %444 = vmatpush.bf16.msra.mxu0 %v430
    %445 = vmatmul.bf16.gmra.mxu0 %v435
    %v446 = vpop.f32.mrf.mxu0
    %v447 = vadd.f32 %v417, %v446
    %v448 = vpop.f32.mrf.mxu0
    %449 = vdwg.mxu0
    %450 = vst [vmem:[#allocation15] sm:$0xff] %v447
    // Predicated region
    $region62: #{decoder_decode.1} parent=1 // pred_check
      %p451 = pneg %p127
    $region63: #{decoder_decode.1} parent=1 // pred_check_branch
      %453 = sbr.rel (%p451) target = $region65
    $region64: #{decoder_decode.1} parent=1 // pred_region
      %v454 = vld [vmem:[#allocation2] sm:$0xff]
      %v455 = vld [vmem:[#allocation2 + $0x8] sm:$0xff]
      %456 = vst.msk [vmem:[#allocation16] sm:$0xff] %vm166, %v454
      %457 = vst.msk [vmem:[#allocation16 + $0x8] sm:$0xff] %vm166, %v455
      %v458 = vld [vmem:[#allocation3] sm:$0xff]
      %v459 = vld [vmem:[#allocation3 + $0x8] sm:$0xff]
      %460 = vst.msk [vmem:[#allocation18] sm:$0xff] %vm166, %v458
      %461 = vst.msk [vmem:[#allocation18 + $0x8] sm:$0xff] %vm166, %v459
    $region65: #{decoder_decode.1} parent=1 // pred_fallthru
      _
    // Predicated region
    $region66: #{decoder_decode.1} parent=1 // pred_check
      _
    $region67: #{decoder_decode.1} parent=1 // pred_check_branch
      %463 = sbr.rel (0) target = $region69
    $region68: #{decoder_decode.1} parent=1 // pred_region
      %465 = vsyncadd [#allocation6], 0
      %s467 = sshll.u32 [#allocation15], 4
      %s468 = int_to_ptr.vmem [resolvable:$true] %s467
      %s469 = sshll.u32 %s8, 4
      %s470 = int_to_ptr.hbm [resolvable:$true] %s469
      %472 = dma.vmem_to_hbm [thread:$0]  %s468, 128, %s470, [#allocation6]
    $region69: #{decoder_decode.1} parent=1 // pred_fallthru
      _
    // Predicated region
    $region70: #{decoder_decode.1} parent=1 // pred_check
      _
    $region71: #{decoder_decode.1} parent=1 // pred_check_branch
      %474 = sbr.rel (0) target = $region73
    $region72: #{decoder_decode.1} parent=1 // pred_region
      %476 = vsyncadd [#allocation17], 0
      %s477 = sshll.u32 [#allocation16], 4
      %s478 = int_to_ptr.vmem [resolvable:$true] %s477
      %s479 = sshll.u32 %s9, 4
      %s480 = int_to_ptr.hbm [resolvable:$true] %s479
      %485 = dma.vmem_to_hbm [thread:$0]  %s478, 256, %s480, [#allocation17], 128, 128, 8
    $region73: #{decoder_decode.1} parent=1 // pred_fallthru
      _
    // Predicated region
    $region74: #{decoder_decode.1} parent=1 // pred_check
      _
    $region75: #{decoder_decode.1} parent=1 // pred_check_branch
      %487 = sbr.rel (0) target = $region77
    $region76: #{decoder_decode.1} parent=1 // pred_region
      %489 = vsyncadd [#allocation17], 0
      %s490 = sshll.u32 [#allocation18], 4
      %s491 = int_to_ptr.vmem [resolvable:$true] %s490
      %s492 = sshll.u32 %s10, 4
      %s493 = int_to_ptr.hbm [resolvable:$true] %s492
      %498 = dma.vmem_to_hbm [thread:$0]  %s491, 256, %s493, [#allocation17], 128, 128, 8
    $region77: #{decoder_decode.1} parent=1 // pred_fallthru
      _
    // Predicated region
    $region78: #{decoder_decode.1} parent=1 // pred_check
      _
    $region79: #{decoder_decode.1} parent=1 // pred_check_branch
      %500 = sbr.rel (0) target = $region81
    $region80: #{decoder_decode.1} parent=1 // pred_region
      %502 = dma.done [#allocation6], 128
    $region81: #{decoder_decode.1} parent=1 // pred_fallthru
      _
    // Predicated region
    $region82: #{decoder_decode.1} parent=1 // pred_check
      _
    $region83: #{decoder_decode.1} parent=1 // pred_check_branch
      %504 = sbr.rel (0) target = $region85
    $region84: #{decoder_decode.1} parent=1 // pred_region
      %506 = dma.done [#allocation17], 256
    $region85: #{decoder_decode.1} parent=1 // pred_fallthru
      _
    // Predicated region
    $region86: #{decoder_decode.1} parent=1 // pred_check
      _
    $region87: #{decoder_decode.1} parent=1 // pred_check_branch
      %508 = sbr.rel (0) target = $region89
    $region88: #{decoder_decode.1} parent=1 // pred_region
      %510 = dma.done [#allocation17], 256
    $region89: #{decoder_decode.1} parent=1 // pred_fallthru
      _
    %511 = vsyncpa [#allocation5], 1
    %512 = vsyncpa [#allocation8], 1
    %513 = vsyncpa [#allocation11], 1
    %514 = vsyncpa [#allocation14], 1
    %515 = vsyncpa [#allocation6], 1
    %516 = vsyncpa [#allocation17], 1

</llo_original>
